<compile_context>
chip_gen: v5e
topology: v5e:2x2
jax: 0.10.0
libtpu: 0.0.40
codegen_flags: <defaults>
</compile_context>

<pallas_src>
import jax
import jax.numpy as jnp
import numpy as np
from jax.experimental import pallas as pl
from jax.experimental.pallas import tpu as pltpu


# ----------------------------------------------------------------------------- helpers

def _tpu_config():
    """Per-generation knobs (exp dtype, VMEM budget, megacore splitting)."""
    kind = ""
    try:
        kind = jax.devices()[0].device_kind.lower()
    except Exception:
        pass
    is_v7 = "v7" in kind
    has_bf16_eup = ("v6" in kind) or is_v7       # bf16 EUP exists on v6e / v7x
    return {
        "exp_dtype": jnp.bfloat16 if has_bf16_eup else jnp.float32,
        # v7x has 64 MiB physical VMEM -> leave headroom; v5e/v6e have 128 MiB.
        "vmem_limit_bytes": (48 if is_v7 else 64) * 1024 * 1024,
        "split_q_for_megacore": is_v7,           # 2 TCs per chip on v7x
    }


def _nearest_resize(mask, h, w):
    # Matches F.interpolate(mode='nearest'): src index = floor(dst * in / out).
    _, _, mh, mw = mask.shape
    ys = (jnp.arange(h) * mh) // h
    xs = (jnp.arange(w) * mw) // w
    return mask[:, :, ys, :][:, :, :, xs]


def _choose_tile(n, max_tile):
    """Largest tile <= max_tile that divides n and is a multiple of 128 (or full n)."""
    if n <= max_tile:
        return n
    t = (max_tile // 128) * 128
    while t >= 128:
        if n % t == 0:
            return t
        t -= 128
    # TODO(synk): ragged N (not a multiple of 128) falls back to one full-length tile;
    # add edge masking before using with very large prime-ish spatial sizes.
    return n


def _static_value(x):
    """Return float(x) if x is concrete at trace time, else None (tracer)."""
    try:
        return float(x)
    except Exception:
        return None


# ----------------------------------------------------------------------------- kernels

def _proj_kernel(fg_ref, bg_ref, mk_ref,
                 wq_ref, bq_ref, wk_ref, bk_ref, wv_ref, bv_ref,
                 q_ref, km_ref, v_ref):
    """Single-pass prologue: Q = Wq@fg + bq, Km = (Wk@bg + bk)*mask, V = Wv@fg + bv.
    bf16 MXU matmuls with f32 accumulation; outputs stored in bf16 (halves the kv stream
    the attention kernel re-reads N/tq times)."""
    fg = fg_ref[0].astype(jnp.bfloat16)
    bg = bg_ref[0].astype(jnp.bfloat16)
    wq = wq_ref[...].astype(jnp.bfloat16)
    wk = wk_ref[...].astype(jnp.bfloat16)
    wv = wv_ref[...].astype(jnp.bfloat16)
    q = jnp.dot(wq, fg, preferred_element_type=jnp.float32) + bq_ref[...]
    k = jnp.dot(wk, bg, preferred_element_type=jnp.float32) + bk_ref[...]
    v = jnp.dot(wv, fg, preferred_element_type=jnp.float32) + bv_ref[...]
    q_ref[0] = q.astype(jnp.bfloat16)
    km_ref[0] = (k * mk_ref[0]).astype(jnp.bfloat16)     # mask folded into K
    v_ref[0] = v.astype(jnp.bfloat16)


def _make_attn_kernel(exp_dtype):
    def _attn_kernel(fg_q_ref, mask_q_ref, q_ref, km_ref, v_ref, gamma_ref,
                     out_ref, m_scr, l_scr, acc_scr):
        ki = pl.program_id(2)
        nk = pl.num_programs(2)

        @pl.when(ki == 0)
        def _init():
            m_scr[...] = jnp.full(m_scr.shape, -1e30, m_scr.dtype)   # running max
            l_scr[...] = jnp.zeros(l_scr.shape, l_scr.dtype)         # running sum
            acc_scr[...] = jnp.zeros(acc_scr.shape, acc_scr.dtype)   # unnormalized out

        # Transposed scores: s[j, i] = (k_j * m_j) . q_i  -> (tk, tq); kv on sublanes so
        # the online-softmax statistics come out as lane-dense (1, tq) rows.
        # (If Mosaic emits a per-step vxpose here, switch to storing K as (N, C).)
        s = jax.lax.dot_general(km_ref[0], q_ref[0],
                                (((0,), (0,)), ((), ())),
                                preferred_element_type=jnp.float32)

        m_prev = m_scr[...]
        m_new = jnp.maximum(m_prev, jnp.max(s, axis=0, keepdims=True))   # (1, tq)
        alpha = jnp.exp(m_prev - m_new)                                  # (1, tq)
        # bf16 exp on v6e/v7x (bf16 EUP), f32 elsewhere; stats stay f32.
        p = jnp.exp((s - m_new).astype(exp_dtype))                       # (tk, tq)
        l_scr[...] = alpha * l_scr[...] + jnp.sum(
            p.astype(jnp.float32), axis=0, keepdims=True)
        acc_scr[...] = alpha * acc_scr[...] + jnp.dot(
            v_ref[0], p.astype(jnp.bfloat16),
            preferred_element_type=jnp.float32)                          # (C, tq)
        m_scr[...] = m_new

        @pl.when(ki == nk - 1)
        def _finalize():
            gamma = gamma_ref[0, 0]            # SMEM scalar
            fg_q = fg_q_ref[0]                 # (C, tq) f32
            m_q = mask_q_ref[0]                # (1, tq) f32
            attn = acc_scr[...] * pl.reciprocal(l_scr[...], approx=True)
            out_ref[0] = (fg_q * m_q + gamma * (1.0 - m_q) * attn).astype(out_ref.dtype)

    return _attn_kernel


def _copy_kernel(fg_ref, mk_ref, out_ref):
    # gamma == 0 path: the module degenerates to out = foreground * mask.
    out_ref[0] = (fg_ref[0] * mk_ref[0]).astype(out_ref.dtype)


# ----------------------------------------------------------------------------- wrappers

def _project(fg, bg, mk, wq, bq, wk, bk, wv, bv, *, vmem_limit_bytes):
    b, c, n = fg.shape
    tn = _choose_tile(n, 1024)
    idx_x = lambda bb, ni: (bb, 0, ni)
    idx_w = lambda bb, ni: (0, 0)
    out_sd = jax.ShapeDtypeStruct((b, c, n), jnp.bfloat16)
    return pl.pallas_call(
        _proj_kernel,
        out_shape=(out_sd, out_sd, out_sd),
        grid_spec=pltpu.PrefetchScalarGridSpec(
            num_scalar_prefetch=0,
            grid=(b, n // tn),
            in_specs=[
                pl.BlockSpec((1, c, tn), idx_x),    # foreground (Q / V input)
                pl.BlockSpec((1, c, tn), idx_x),    # background (K input)
                pl.BlockSpec((1, 1, tn), idx_x),    # mask (folded into K)
                pl.BlockSpec((c, c), idx_w), pl.BlockSpec((c, 1), idx_w),   # Wq, bq
                pl.BlockSpec((c, c), idx_w), pl.BlockSpec((c, 1), idx_w),   # Wk, bk
                pl.BlockSpec((c, c), idx_w), pl.BlockSpec((c, 1), idx_w),   # Wv, bv
            ],
            out_specs=[pl.BlockSpec((1, c, tn), idx_x)] * 3,
        ),
        compiler_params=pltpu.CompilerParams(
            dimension_semantics=("parallel", "parallel"),
            vmem_limit_bytes=vmem_limit_bytes,
        ),
    )(fg, bg, mk, wq, bq, wk, bk, wv, bv)


def _attention(fg, mk, q, km, v, gamma, out_dtype, *, max_tile, cfg):
    b, c, n = fg.shape
    tq = _choose_tile(n, max_tile)
    if cfg["split_q_for_megacore"] and b * (n // tq) < 2 and n % 256 == 0:
        tq = _choose_tile(n, max(128, n // 2))   # give both v7x TensorCores q-tiles
    tk = _choose_tile(n, max_tile)
    grid = (b, n // tq, n // tk)

    gamma_smem = jnp.asarray(gamma, jnp.float32).reshape(1, 1)

    idx_q = lambda bb, qi, ki: (bb, 0, qi)     # query-tile indexed operands
    idx_kv = lambda bb, qi, ki: (bb, 0, ki)    # kv-tile indexed operands

    cost = pl.CostEstimate(
        flops=int(4 * b * n * n * c),
        transcendentals=int(b * n * n),
        bytes_accessed=int((fg.size + mk.size) * 4 + q.size * 2
                           + (km.size + v.size) * 2 * (n // tq)
                           + b * c * n * 4),
    )

    return pl.pallas_call(
        _make_attn_kernel(cfg["exp_dtype"]),
        out_shape=jax.ShapeDtypeStruct((b, c, n), out_dtype),
        grid_spec=pltpu.PrefetchScalarGridSpec(
            num_scalar_prefetch=0,
            grid=grid,
            in_specs=[
                pl.BlockSpec((1, c, tq), idx_q),     # foreground q-tile (final blend)
                pl.BlockSpec((1, 1, tq), idx_q),     # mask q-tile (final blend)
                pl.BlockSpec((1, c, tq), idx_q),     # Q       (bf16, precomputed)
                pl.BlockSpec((1, c, tk), idx_kv),    # K*mask  (bf16, precomputed)
                pl.BlockSpec((1, c, tk), idx_kv),    # V       (bf16, precomputed)
                pl.BlockSpec(memory_space=pltpu.MemorySpace.SMEM),   # gamma scalar
            ],
            out_specs=pl.BlockSpec((1, c, tq), idx_q),
            scratch_shapes=[
                pltpu.VMEM((1, tq), jnp.float32),    # running max
                pltpu.VMEM((1, tq), jnp.float32),    # running sum
                pltpu.VMEM((c, tq), jnp.float32),    # unnormalized output accumulator
            ],
        ),
        compiler_params=pltpu.CompilerParams(
            dimension_semantics=("parallel", "parallel", "arbitrary"),
            vmem_limit_bytes=cfg["vmem_limit_bytes"],
        ),
        cost_estimate=cost,
    )(fg, mk, q, km, v, gamma_smem)


def _masked_copy(fg, mk, out_dtype, *, vmem_limit_bytes):
    b, c, n = fg.shape
    t = _choose_tile(n, 2048)
    idx = lambda bb, ni: (bb, 0, ni)
    return pl.pallas_call(
        _copy_kernel,
        out_shape=jax.ShapeDtypeStruct((b, c, n), out_dtype),
        grid_spec=pltpu.PrefetchScalarGridSpec(
            num_scalar_prefetch=0,
            grid=(b, n // t),
            in_specs=[pl.BlockSpec((1, c, t), idx),
                      pl.BlockSpec((1, 1, t), idx)],
            out_specs=pl.BlockSpec((1, c, t), idx),
        ),
        compiler_params=pltpu.CompilerParams(
            dimension_semantics=("parallel", "parallel"),
            vmem_limit_bytes=vmem_limit_bytes,
        ),
    )(fg, mk)


def mask_pruning_global_attention_spatial(foreground, background, params, mask=None,
                                          *, max_tile=1024):
    wq, bq, wk, bk, wv, bv, gamma = params
    b, c, h, w = foreground.shape
    assert h == w, "PyTorch forward broadcasts (b,c,w,h) against (b,c,h,w); requires h == w"
    n = h * w
    cfg = _tpu_config()
    out_dtype = foreground.dtype

    if mask is None:
        mask = jnp.ones((b, 1, h, w), jnp.float32)
    else:
        mask = _nearest_resize(mask.astype(jnp.float32), h, w)

    # Channels-first flattening (no transpose needed from NCHW); N on the lane axis.
    fg = foreground.reshape(b, c, n).astype(jnp.float32)
    mk = mask.reshape(b, 1, n)

    gamma_static = _static_value(gamma)

    # gamma == 0 known at trace time (module default init): attention is dead ->
    # fused masked copy; no attention grid, no kv DMA, no projections.
    if gamma_static == 0.0:
        out = _masked_copy(fg, mk, out_dtype, vmem_limit_bytes=cfg["vmem_limit_bytes"])
        return out.reshape(b, c, h, w)

    bg = background.reshape(b, c, n).astype(jnp.float32)
    wq_ = jnp.asarray(wq, jnp.float32)
    wk_ = jnp.asarray(wk, jnp.float32)
    wv_ = jnp.asarray(wv, jnp.float32)
    bq_ = jnp.asarray(bq, jnp.float32).reshape(c, 1)
    bk_ = jnp.asarray(bk, jnp.float32).reshape(c, 1)
    bv_ = jnp.asarray(bv, jnp.float32).reshape(c, 1)

    def attn_path(operands):
        fg_, bg_, mk_ = operands
        q, km, v = _project(fg_, bg_, mk_, wq_, bq_, wk_, bk_, wv_, bv_,
                            vmem_limit_bytes=cfg["vmem_limit_bytes"])
        return _attention(fg_, mk_, q, km, v, gamma, out_dtype,
                          max_tile=max_tile, cfg=cfg)

    def copy_path(operands):
        fg_, _, mk_ = operands
        return _masked_copy(fg_, mk_, out_dtype,
                            vmem_limit_bytes=cfg["vmem_limit_bytes"])

    if gamma_static is not None:
        out = attn_path((fg, bg, mk))          # statically non-zero gamma
    else:
        # gamma only known at run time (learned parameter under jit): don't pay for the
        # attention grid / kv stream when it is zero.
        out = jax.lax.cond(jnp.asarray(gamma, jnp.float32).reshape(()) != 0.0,
                           attn_path, copy_path, (fg, bg, mk))

    return out.reshape(b, c, h, w)


# ----------------------------------------------------------------------------- reference

def reference_forward(foreground, background, params, mask=None):
    """Pure-JAX transcription of the PyTorch forward (NCHW), for validation."""
    wq, bq, wk, bk, wv, bv, gamma = params
    b, c, h, w = foreground.shape
    if mask is None:
        mask = jnp.ones((b, 1, h, w), jnp.float32)
    else:
        mask = _nearest_resize(mask.astype(jnp.float32), h, w)

    hi = jax.lax.Precision.HIGHEST
    conv1x1 = lambda x, W, bias: (
        jnp.einsum('oi,bihw->bohw', W, x, precision=hi) + bias[None, :, None, None])

    proj_query = conv1x1(foreground, wq, bq).reshape(b, c, w * h).transpose(0, 2, 1)
    proj_key = conv1x1(background, wk, bk).reshape(b, c, w * h)
    feature_similarity = jnp.einsum('bnc,bcm->bnm', proj_query, proj_key, precision=hi)
    mask_view = mask.reshape(b, 1, w * h)
    attention = jax.nn.softmax(feature_similarity * mask_view, axis=-1)
    value = conv1x1(foreground, wv, bv).reshape(b, c, w * h)
    feature_pruning = jnp.einsum('bcn,bin->bci', value, attention, precision=hi)
    out = feature_pruning.reshape(b, c, w, h)        # the .view(b, c, w, h) quirk
    return foreground * mask + gamma * (1.0 - mask) * out


def init_params(key, c):
    ks = jax.random.split(key, 6)
    wq = 0.3 * jax.random.normal(ks[0], (c, c), jnp.float32)   # (C_out, C_in)
    bq = 0.1 * jax.random.normal(ks[1], (c,), jnp.float32)
    wk = 0.3 * jax.random.normal(ks[2], (c, c), jnp.float32)
    bk = 0.1 * jax.random.normal(ks[3], (c,), jnp.float32)
    wv = 0.3 * jax.random.normal(ks[4], (c, c), jnp.float32)
    bv = 0.1 * jax.random.normal(ks[5], (c,), jnp.float32)
    gamma = jnp.float32(0.0)   # module __init__ sets gamma = 0.0
    return (wq, bq, wk, bk, wv, bv, gamma)


if __name__ == "__main__":
    key = jax.random.PRNGKey(0)
    k_fg, k_bg, k_mask, k_params = jax.random.split(key, 4)

    B, C, H, W = 2, 4, 16, 16
    foreground = jax.random.normal(k_fg, (B, C, H, W), jnp.float32)
    background = jax.random.normal(k_bg, (B, C, H, W), jnp.float32)
    # low-resolution binary mask, nearest-upsampled inside the wrapper (glue)
    mask = (jax.random.uniform(k_mask, (B, 1, 4, 4)) > 0.4).astype(jnp.float32)

    params = init_params(k_params, C)

    # gamma == 0 (module default, statically known) -> fused masked-copy kernel only.
    out0 = mask_pruning_global_attention_spatial(foreground, background, params, mask)
    jax.block_until_ready(out0)
    ref0 = reference_forward(foreground, background, params, mask)
    np.testing.assert_allclose(np.asarray(out0), np.asarray(ref0), rtol=1e-5, atol=1e-5)

    # statically non-zero gamma: bf16 projection prologue + flash attention (1 kv tile).
    params_g = params[:-1] + (jnp.float32(0.7),)
    ref1 = reference_forward(foreground, background, params_g, mask)
    out1 = mask_pruning_global_attention_spatial(foreground, background, params_g, mask)
    jax.block_until_ready(out1)
    np.testing.assert_allclose(np.asarray(out1), np.asarray(ref1), rtol=2e-2, atol=2e-2)

    # flash tiling exercised: 128-wide q/kv tiles, grid = (2, 2, 2).
    out2 = mask_pruning_global_attention_spatial(foreground, background, params_g, mask,
                                                 max_tile=128)
    jax.block_until_ready(out2)
    np.testing.assert_allclose(np.asarray(out2), np.asarray(ref1), rtol=2e-2, atol=2e-2)

    # mask=None path (defaults to all-ones mask).
    out3 = mask_pruning_global_attention_spatial(foreground, background, params_g, None)
    jax.block_until_ready(out3)
    ref3 = reference_forward(foreground, background, params_g, None)
    np.testing.assert_allclose(np.asarray(out3), np.asarray(ref3), rtol=2e-2, atol=2e-2)

    # traced gamma under jit: lax.cond picks attention vs masked-copy path at run time.
    jitted = jax.jit(lambda g: mask_pruning_global_attention_spatial(
        foreground, background, params[:-1] + (g,), mask))
    out4 = jitted(jnp.float32(0.7))
    jax.block_until_ready(out4)
    np.testing.assert_allclose(np.asarray(out4), np.asarray(ref1), rtol=2e-2, atol=2e-2)
    out5 = jitted(jnp.float32(0.0))
    jax.block_until_ready(out5)
    np.testing.assert_allclose(np.asarray(out5), np.asarray(ref0), rtol=1e-5, atol=1e-5)

    print("KERNEL_OK")
</pallas_src>

<mosaic_0001>
module attributes {stable_mosaic.version = 11 : i64} {
  func.func @_copy_kernel(%arg0: i32, %arg1: i32, %arg2: memref<1x4x256xf32, #tpu.memory_space<vmem>>, %arg3: memref<1x1x256xf32, #tpu.memory_space<vmem>>, %arg4: memref<1x4x256xf32, #tpu.memory_space<vmem>>) attributes {dimension_semantics = [#tpu.dimension_semantics<parallel>, #tpu.dimension_semantics<parallel>], iteration_bounds = array<i64: 2, 1>, scalar_prefetch = 0 : i64, scratch_operands = 0 : i64, tpu.core_type = #tpu.core_type<tc>, window_params = [{transform_indices = @transform_0, window_bounds = array<i64: 1, 4, 256>}, {transform_indices = @transform_1, window_bounds = array<i64: 1, 1, 256>}, {transform_indices = @transform_2, window_bounds = array<i64: 1, 4, 256>}]} {
    %c0 = arith.constant 0 : index
    %c0_0 = arith.constant 0 : index
    %c0_1 = arith.constant 0 : index
    %0 = vector.load %arg2[%c0, %c0_0, %c0_1] : memref<1x4x256xf32, #tpu.memory_space<vmem>>, vector<1x4x256xf32>
    %1 = vector.shape_cast %0 : vector<1x4x256xf32> to vector<4x256xf32>
    %c0_2 = arith.constant 0 : index
    %c0_3 = arith.constant 0 : index
    %c0_4 = arith.constant 0 : index
    %2 = vector.load %arg3[%c0_2, %c0_3, %c0_4] : memref<1x1x256xf32, #tpu.memory_space<vmem>>, vector<1x1x256xf32>
    %3 = vector.shape_cast %2 : vector<1x1x256xf32> to vector<1x256xf32>
    %4 = vector.broadcast %3 : vector<1x256xf32> to vector<4x256xf32>
    %5 = arith.mulf %1, %4 : vector<4x256xf32>
    %c0_5 = arith.constant 0 : index
    %c0_6 = arith.constant 0 : index
    %c0_7 = arith.constant 0 : index
    %6 = vector.load %arg4[%c0_5, %c0_6, %c0_7] : memref<1x4x256xf32, #tpu.memory_space<vmem>>, vector<1x4x256xf32>
    %7 = vector.shape_cast %6 : vector<1x4x256xf32> to vector<4x256xf32>
    %8 = vector.shape_cast %5 : vector<4x256xf32> to vector<1x4x256xf32>
    tpu.vector_store %arg4[%c0_5, %c0_6, %c0_7], %8 {strides = array<i32>} : memref<1x4x256xf32, #tpu.memory_space<vmem>>, vector<1x4x256xf32>,
    return
  }
  func.func @transform_0(%arg0: i32, %arg1: i32) -> (i32, i32, i32) {
    %c0_i32 = arith.constant 0 : i32
    %c0_i32_0 = arith.constant 0 : i32
    return %arg0, %c0_i32, %arg1 : i32, i32, i32
  }
  func.func @transform_1(%arg0: i32, %arg1: i32) -> (i32, i32, i32) {
    %c0_i32 = arith.constant 0 : i32
    %c0_i32_0 = arith.constant 0 : i32
    return %arg0, %c0_i32, %arg1 : i32, i32, i32
  }
  func.func @transform_2(%arg0: i32, %arg1: i32) -> (i32, i32, i32) {
    %c0_i32 = arith.constant 0 : i32
    %c0_i32_0 = arith.constant 0 : i32
    return %arg0, %c0_i32, %arg1 : i32, i32, i32
  }
}

</mosaic_0001>

<llo_original>
// kernel: tpu_custom_call.1
$region0: #{tpu_custom_call.1}
  #allocation0 [shape = 'u32[]', space=smem, size = 0x4, offset = 0x4, fixed_abs, tag = 'smem constant byte address 0x4 - core index']
  #allocation1 [shape = 'u32[72,128]{1,0:T(1,128)}', space=vmem, size = 0x9000, scoped, tag = 'internal scratch']
  %s0 = inlined_call_operand.hbm [shape: f32[2,4,256], index: 0, kind: input, shape index: {}]
  %s1 = inlined_call_operand.hbm [shape: f32[2,1,256], index: 1, kind: input, shape index: {}]
  %s2 = inlined_call_operand.hbm [shape: f32[2,4,256], index: 2, kind: output, shape index: {}]
  %s3 = sld [smem:[#allocation0]]
  $region49: #{tpu_custom_call.1} parent=0
    _
  %s5 = ssub.s32 1, %s3
  %s6 = scalar_select 0, %s5, %s3
  $region1: #{tpu_custom_call.1} parent=0
    #allocation2 [shape = 'u8[8192]{0}', space=vmem, size = 0x2000, scoped, tag = 'input window, operand 0']
    #allocation3 [shape = 's32[2]{0}', space=sflag, size = 0x8, scoped, tag = 'scoped memory for tpu_custom_call.1']
    #allocation4 [shape = 's32[2]{0}', space=sflag, size = 0x8, scoped, tag = 'scoped memory for tpu_custom_call.1']
    #allocation5 [shape = 'u8[2048]{0}', space=vmem, size = 0x800, scoped, tag = 'input window, operand 1']
    #allocation6 [shape = 's32[2]{0}', space=sflag, size = 0x8, scoped, tag = 'scoped memory for tpu_custom_call.1']
    #allocation7 [shape = 'u8[8192]{0}', space=vmem, size = 0x2000, scoped, tag = 'output window, operand 0']
    %7 = vsyncpa [#allocation3], 0
    %s8 = scalar_lea.sflag [#allocation3], 1
    %9 = vsyncpa %s8, 0
    %10 = vsyncpa [#allocation6], 0
    %s11 = scalar_lea.sflag [#allocation6], 1
    %12 = vsyncpa %s11, 0
    %13 = vsyncpa [#allocation4], 0
    %s14 = scalar_lea.sflag [#allocation4], 1
    %15 = vsyncpa %s14, 0
    loop: start=0, step=1, limit=4
    $region2: #{tpu_custom_call.1} parent=1 // loop_pre_header
      _
    $region3: #{tpu_custom_call.1} parent=1 // loop_header
      %s17 = sphi 0, %s21
      %p18 = scmp.ge.s32.totalorder %s17, 4
      %s24 = sphi 0, %s36
      %s25 = sphi 0, %s32
      %s26 = sphi 0, %s24
      %s27 = sphi 0, %s25
      %s28 = sphi 0, %s26
      %s29 = sphi 0, %s27
      %s41 = sphi 0, %s43
      %s44 = sphi 0, %s41
      %s45 = sphi 0, %s44
      %s61 = sphi 0, %s45
      %s69 = sphi 0, %s71
      %s72 = sphi 0, %s69
      %s73 = sphi 0, %s72
      %s89 = sphi 0, %s73
      %s97 = sphi 0, %s99
      %s100 = sphi 0, %s97
      %s101 = sphi 0, %s100
      %s117 = sphi 0, %s101
    $region4: #{tpu_custom_call.1} parent=1 // loop_header_branch
      %20 = sbr.rel (%p18) target = $region8
    $region5: #{tpu_custom_call.1} parent=1 // loop_body
      %s22 = ssub.s32 %s17, 1
      %s23 = ssub.s32 %s17, 2
      %s30 = sadd.s32 1, %s25
      %p31 = scmp.ge.s32.totalorder %s30, 1
      %s32 = scalar_select %p31, 0, %s30
      %s33 = sadd.s32 1, %s24
      %s34 = scalar_select %p31, %s33, %s24
      %p35 = scmp.ge.s32.totalorder %s34, 2
      %s36 = scalar_select %p35, 0, %s34
      %s37 = ssub.s32 %s24, %s36
      %s38 = ssub.s32 %s25, %s32
      %s39 = sor.u32 %s37, %s38
      %p40 = scmp.eq.s32.totalorder %s39, 0
      %s42 = sadd.s32 %s41, 1
      %s43 = scalar_select %p40, %s41, %s42
      %p46 = pneg %p40
      %p47 = scmp.eq.s32.totalorder %s17, 1
      %p48 = por %p46, %p47
      %p49 = scmp.ne.s32.totalorder %s41, %s44
      %p50 = scmp.eq.s32.totalorder %s17, 0
      %p51 = por %p49, %p50
      %p52 = scmp.ne.s32.totalorder %s41, %s44
      %p53 = scmp.eq.s32.totalorder %s22, 1
      %p54 = por %p52, %p53
      %p55 = scmp.ne.s32.totalorder %s44, %s45
      %p56 = scmp.eq.s32.totalorder %s22, 0
      %p57 = por %p55, %p56
      %p58 = scmp.ne.s32.totalorder %s44, %s45
      %p59 = scmp.eq.s32.totalorder %s23, 1
      %p60 = por %p58, %p59
      %p62 = scmp.ne.s32.totalorder %s45, %s61
      %p63 = scmp.eq.s32.totalorder %s23, 0
      %p64 = por %p62, %p63
      %s65 = ssub.s32 %s24, %s36
      %s66 = ssub.s32 %s25, %s32
      %s67 = sor.u32 %s65, %s66
      %p68 = scmp.eq.s32.totalorder %s67, 0
      %s70 = sadd.s32 %s69, 1
      %s71 = scalar_select %p68, %s69, %s70
      %p74 = pneg %p68
      %p75 = scmp.eq.s32.totalorder %s17, 1
      %p76 = por %p74, %p75
      %p77 = scmp.ne.s32.totalorder %s69, %s72
      %p78 = scmp.eq.s32.totalorder %s17, 0
      %p79 = por %p77, %p78
      %p80 = scmp.ne.s32.totalorder %s69, %s72
      %p81 = scmp.eq.s32.totalorder %s22, 1
      %p82 = por %p80, %p81
      %p83 = scmp.ne.s32.totalorder %s72, %s73
      %p84 = scmp.eq.s32.totalorder %s22, 0
      %p85 = por %p83, %p84
      %p86 = scmp.ne.s32.totalorder %s72, %s73
      %p87 = scmp.eq.s32.totalorder %s23, 1
      %p88 = por %p86, %p87
      %p90 = scmp.ne.s32.totalorder %s73, %s89
      %p91 = scmp.eq.s32.totalorder %s23, 0
      %p92 = por %p90, %p91
      %s93 = ssub.s32 %s24, %s36
      %s94 = ssub.s32 %s25, %s32
      %s95 = sor.u32 %s93, %s94
      %p96 = scmp.eq.s32.totalorder %s95, 0
      %s98 = sadd.s32 %s97, 1
      %s99 = scalar_select %p96, %s97, %s98
      %p102 = pneg %p96
      %p103 = scmp.eq.s32.totalorder %s17, 1
      %p104 = por %p102, %p103
      %p105 = scmp.ne.s32.totalorder %s97, %s100
      %p106 = scmp.eq.s32.totalorder %s17, 0
      %p107 = por %p105, %p106
      %p108 = scmp.ne.s32.totalorder %s97, %s100
      %p109 = scmp.eq.s32.totalorder %s22, 1
      %p110 = por %p108, %p109
      %p111 = scmp.ne.s32.totalorder %s100, %s101
      %p112 = scmp.eq.s32.totalorder %s22, 0
      %p113 = por %p111, %p112
      %p114 = scmp.ne.s32.totalorder %s100, %s101
      %p115 = scmp.eq.s32.totalorder %s23, 1
      %p116 = por %p114, %p115
      %p118 = scmp.ne.s32.totalorder %s101, %s117
      %p119 = scmp.eq.s32.totalorder %s23, 0
      %p120 = por %p118, %p119
      %p121 = scmp.le.s32.totalorder 1, %s17
      %p122 = scmp.lt.s32.totalorder %s17, 3
      %p123 = pnand %p121, %p122
      %p124 = pneg %p123
      // Predicated region
      $region9: #{tpu_custom_call.1} parent=5 // pred_check
        _
      $region10: #{tpu_custom_call.1} parent=5 // pred_check_branch
        %126 = sbr.rel (%p123) target = $region12
      $region11: #{tpu_custom_call.1} parent=5 // pred_region
        %s127 = ssub.s32 %s17, 1
      $region12: #{tpu_custom_call.1} parent=5 // pred_fallthru
        _
      %p128 = scmp.lt.s32.totalorder %s17, 2
      // Predicated region
      $region13: #{tpu_custom_call.1} parent=5 // pred_check
        %p129 = pneg %p128
      $region14: #{tpu_custom_call.1} parent=5 // pred_check_branch
        %131 = sbr.rel (%p129) target = $region16
      $region15: #{tpu_custom_call.1} parent=5 // pred_region
        // Predicated region
        $region17: #{tpu_custom_call.1} parent=15 // pred_check
          %p132 = pneg %p51
        $region18: #{tpu_custom_call.1} parent=15 // pred_check_branch
          %134 = sbr.rel (%p132) target = $region20
        $region19: #{tpu_custom_call.1} parent=15 // pred_region
          %s135 = sand.u32 %s41, 1
          %s136 = scalar_lea.sflag [#allocation3], %s135
          %s137 = sand.u32 %s41, 1
          %s138 = smul.addr %s137, 8
          %s139 = scalar_lea.vmem [#allocation2], %s138
          %s140 = smul.u32 2, %s25
          %142 = vsyncadd %s136, 0
          %s143 = smul.addr %s24, 2
          %s144 = sadd.s32 %s140, %s143
          %s145 = smul.addr %s144, 4
          %s146 = scalar_lea.hbm %s0, %s145
          %s148 = sshll.u32 %s146, 4
          %s149 = int_to_ptr.hbm [resolvable:$true] %s148
          %s150 = sshll.u32 %s139, 4
          %s151 = int_to_ptr.vmem [resolvable:$true] %s150
          %153 = dma.hbm_to_vmem [thread:$0]  %s149, 128, %s151, %s136
        $region20: #{tpu_custom_call.1} parent=15 // pred_fallthru
          _
        // Predicated region
        $region21: #{tpu_custom_call.1} parent=15 // pred_check
          %p154 = pneg %p79
        $region22: #{tpu_custom_call.1} parent=15 // pred_check_branch
          %156 = sbr.rel (%p154) target = $region24
        $region23: #{tpu_custom_call.1} parent=15 // pred_region
          %s157 = sand.u32 %s69, 1
          %s158 = scalar_lea.sflag [#allocation6], %s157
          %s159 = sand.u32 %s69, 1
          %s160 = smul.addr %s159, 2
          %s161 = scalar_lea.vmem [#allocation5], %s160
          %s162 = smul.u32 2, %s25
          %164 = vsyncadd %s158, 0
          %s165 = smul.addr %s24, 2
          %s166 = sadd.s32 %s162, %s165
          %s167 = scalar_lea.hbm %s1, %s166
          %s169 = sshll.u32 %s167, 4
          %s170 = int_to_ptr.hbm [resolvable:$true] %s169
          %s171 = sshll.u32 %s161, 4
          %s172 = int_to_ptr.vmem [resolvable:$true] %s171
          %174 = dma.hbm_to_vmem [thread:$0]  %s170, 32, %s172, %s158
        $region24: #{tpu_custom_call.1} parent=15 // pred_fallthru
          _
      $region16: #{tpu_custom_call.1} parent=5 // pred_fallthru
        _
      %p175 = scmp.le.s32.totalorder 1, %s17
      %p176 = scmp.lt.s32.totalorder %s17, 3
      %p177 = pnand %p175, %p176
      %p178 = pneg %p177
      // Predicated region
      $region25: #{tpu_custom_call.1} parent=5 // pred_check
        _
      $region26: #{tpu_custom_call.1} parent=5 // pred_check_branch
        %180 = sbr.rel (%p177) target = $region28
      $region27: #{tpu_custom_call.1} parent=5 // pred_region
        %s181 = ssub.s32 %s17, 1
        %s182 = sand.u32 %s44, 1
        %s183 = scalar_lea.sflag [#allocation3], %s182
        %s184 = sand.u32 %s44, 1
        %s185 = smul.addr %s184, 8
        %s186 = scalar_lea.vmem [#allocation2], %s185
        // Predicated region
        $region29: #{tpu_custom_call.1} parent=27 // pred_check
          %p187 = pneg %p57
        $region30: #{tpu_custom_call.1} parent=27 // pred_check_branch
          %189 = sbr.rel (%p187) target = $region32
        $region31: #{tpu_custom_call.1} parent=27 // pred_region
          %191 = dma.done %s183, 128
        $region32: #{tpu_custom_call.1} parent=27 // pred_fallthru
          _
        %s192 = sand.u32 %s72, 1
        %s193 = scalar_lea.sflag [#allocation6], %s192
        %s194 = sand.u32 %s72, 1
        %s195 = smul.addr %s194, 2
        %s196 = scalar_lea.vmem [#allocation5], %s195
        // Predicated region
        $region33: #{tpu_custom_call.1} parent=27 // pred_check
          %p197 = pneg %p85
        $region34: #{tpu_custom_call.1} parent=27 // pred_check_branch
          %199 = sbr.rel (%p197) target = $region36
        $region35: #{tpu_custom_call.1} parent=27 // pred_region
          %201 = dma.done %s193, 32
        $region36: #{tpu_custom_call.1} parent=27 // pred_fallthru
          _
        %s202 = sand.u32 %s44, 1
        %s203 = scalar_lea.sflag [#allocation3], %s202
        %s204 = sand.u32 %s44, 1
        %s205 = smul.addr %s204, 8
        %s206 = scalar_lea.vmem [#allocation2], %s205
        %p207 = pneg %p57
        %p208 = pneg %p54
        %s209 = sand.u32 %s72, 1
        %s210 = scalar_lea.sflag [#allocation6], %s209
        %s211 = sand.u32 %s72, 1
        %s212 = smul.addr %s211, 2
        %s213 = scalar_lea.vmem [#allocation5], %s212
        %p214 = pneg %p85
        %p215 = pneg %p82
        %p216 = pneg %p113
        %p217 = pneg %p110
        %s218 = sand.u32 %s100, 1
        %s219 = scalar_lea.sflag [#allocation4], %s218
        %s220 = sand.u32 %s100, 1
        %s221 = smul.addr %s220, 8
        %s222 = scalar_lea.vmem [#allocation7], %s221
        %s223 = smul.u32 2, %s27
        %s224 = smul.u32 2, %s27
        %s225 = smul.u32 2, %s27
        %v226 = vld [vmem:[%s186] sm:$0xff]
        %v227 = vld [vmem:[%s196] sm:$0x3]
        %v229 = vperm.slane %v227, 0
        %v230 = vperm.slane %v227, 1
        %v231 = vrot.slane %v230, 4
        %vm232 = vcmask 1043456
        %v233 = vsel %vm232, %v229, %v231
        %v235 = vmul.f32 %v226, %v233
        %236 = vst [vmem:[%s222] sm:$0xff] %v235
        %s237 = sand.u32 %s100, 1
        %s238 = scalar_lea.sflag [#allocation4], %s237
        %s239 = sand.u32 %s100, 1
        %s240 = smul.addr %s239, 8
        %s241 = scalar_lea.vmem [#allocation7], %s240
        // Predicated region
        $region37: #{tpu_custom_call.1} parent=27 // pred_check
          %p242 = pneg %p110
        $region38: #{tpu_custom_call.1} parent=27 // pred_check_branch
          %244 = sbr.rel (%p242) target = $region40
        $region39: #{tpu_custom_call.1} parent=27 // pred_region
          %s245 = smul.u32 2, %s27
          %247 = vsyncadd %s238, 0
          %s248 = smul.addr %s26, 2
          %s249 = sadd.s32 %s245, %s248
          %s250 = smul.addr %s249, 4
          %s251 = scalar_lea.hbm %s2, %s250
          %s253 = sshll.u32 %s241, 4
          %s254 = int_to_ptr.vmem [resolvable:$true] %s253
          %s255 = sshll.u32 %s251, 4
          %s256 = int_to_ptr.hbm [resolvable:$true] %s255
          %258 = dma.vmem_to_hbm [thread:$0]  %s254, 128, %s256, %s238
        $region40: #{tpu_custom_call.1} parent=27 // pred_fallthru
          _
      $region28: #{tpu_custom_call.1} parent=5 // pred_fallthru
        _
      %p259 = scmp.le.s32.totalorder 2, %s17
      // Predicated region
      $region41: #{tpu_custom_call.1} parent=5 // pred_check
        %p260 = pneg %p259
      $region42: #{tpu_custom_call.1} parent=5 // pred_check_branch
        %262 = sbr.rel (%p260) target = $region44
      $region43: #{tpu_custom_call.1} parent=5 // pred_region
        %s263 = ssub.s32 %s17, 2
        // Predicated region
        $region45: #{tpu_custom_call.1} parent=43 // pred_check
          %p264 = pneg %p116
        $region46: #{tpu_custom_call.1} parent=43 // pred_check_branch
          %266 = sbr.rel (%p264) target = $region48
        $region47: #{tpu_custom_call.1} parent=43 // pred_region
          %s267 = sand.u32 %s101, 1
          %s268 = scalar_lea.sflag [#allocation4], %s267
          %s269 = sand.u32 %s101, 1
          %s270 = smul.addr %s269, 8
          %s271 = scalar_lea.vmem [#allocation7], %s270
          %273 = dma.done %s268, 128
        $region48: #{tpu_custom_call.1} parent=43 // pred_fallthru
          _
      $region44: #{tpu_custom_call.1} parent=5 // pred_fallthru
        _
    $region6: #{tpu_custom_call.1} parent=1 // loop_footer
      %s21 = sadd.s32 1, %s17
    $region7: #{tpu_custom_call.1} parent=1 // loop_footer_branch
      %16 = sbr.rel target = $region3
    $region8: #{tpu_custom_call.1} parent=1 // loop_exit
      _
    %274 = vsyncpa [#allocation3], 1
    %s275 = scalar_lea.sflag [#allocation3], 1
    %276 = vsyncpa %s275, 1
    %277 = vsyncpa [#allocation6], 1
    %s278 = scalar_lea.sflag [#allocation6], 1
    %279 = vsyncpa %s278, 1
    %280 = vsyncpa [#allocation4], 1
    %s281 = scalar_lea.sflag [#allocation4], 1
    %282 = vsyncpa %s281, 1

</llo_original>
